<compile_context>
chip_gen: v7x
topology: tpu7x:2x2x1
jax: 0.10.0
libtpu: 0.0.40
codegen_flags: <defaults>
</compile_context>

<pallas_src>
import jax
import jax.numpy as jnp
from jax.experimental import pallas as pl
from jax.experimental.pallas import tpu as pltpu


def _mish(x):
    # mish(x) = x * tanh(softplus(x)).
    # With t = e^x:  tanh(log1p(t)) = (t^2 + 2t) / (t^2 + 2t + 2),
    # so one exp + one (approx, EUP-cheap) reciprocal instead of 3 transcendentals.
    # Clamp the exponent input: mish(x) ~= x for x > 20 and ~= 0 for x < -20,
    # and the rational form reproduces exactly that at the clamp points.
    t = jnp.exp(jnp.clip(x, -20.0, 20.0))
    u = t * (t + 2.0)
    return x * u * pl.reciprocal(u + 2.0, approx=True)


def mlp_kernel(x_ref, w1_ref, b1_ref, w2_ref, b2_ref, w3_ref, b3_ref, o_ref):
    x = x_ref[...]                      # (TB, D) f32 — already f32, no astype
    w1 = w1_ref[...]                    # (D, H1)
    tb = x.shape[0]
    d = x.shape[1]
    h1_dim = w1.shape[1]

    # layer1: K = D (= 4) contraction unrolled on the VPU — avoids an MXU
    # push/drain round-trip on the critical path of three dependent matmuls.
    h1 = jnp.broadcast_to(b1_ref[...], (tb, h1_dim)).astype(jnp.float32)
    for k in range(d):                  # d is static -> fully unrolled
        h1 = h1 + x[:, k:k + 1] * w1[k:k + 1, :]
    h1 = _mish(h1)

    # layer2: 50x50 -> MXU
    h2 = jnp.dot(h1, w2_ref[...], preferred_element_type=jnp.float32) + b2_ref[...]
    h2 = _mish(h2)

    # layer3 + softmax over dim=1 (classes)
    logits = jnp.dot(h2, w3_ref[...], preferred_element_type=jnp.float32) + b3_ref[...]
    m = jnp.max(logits, axis=1, keepdims=True)
    e = jnp.exp(logits - m)
    denom = jnp.sum(e, axis=1, keepdims=True)
    o_ref[...] = (e * pl.reciprocal(denom, approx=True)).astype(o_ref.dtype)


def mlp_forward(x, params, *, tb=1024):
    """Fused forward pass. tb = batch tile (rows per grid step)."""
    w1, b1, w2, b2, w3, b3 = params
    B, D = x.shape
    H1 = w1.shape[1]
    H2 = w2.shape[1]
    n_out = w3.shape[1]

    # Batch tile: multiple of 8 (sublane), no larger than the (padded) batch.
    b_pad8 = ((B + 7) // 8) * 8
    tb = max(8, min(((tb + 7) // 8) * 8, b_pad8))
    Bp = ((B + tb - 1) // tb) * tb
    if Bp != B:
        x = jnp.pad(x, ((0, Bp - B), (0, 0)))   # zero rows -> finite junk, sliced off below

    grid = (Bp // tb,)

    out = pl.pallas_call(
        mlp_kernel,
        out_shape=jax.ShapeDtypeStruct((Bp, n_out), jnp.float32),
        grid=grid,
        in_specs=[
            pl.BlockSpec((tb, D), lambda i: (i, 0)),       # x: streamed per batch tile
            pl.BlockSpec((D, H1), lambda i: (0, 0)),       # weights/biases: resident
            pl.BlockSpec((1, H1), lambda i: (0, 0)),
            pl.BlockSpec((H1, H2), lambda i: (0, 0)),
            pl.BlockSpec((1, H2), lambda i: (0, 0)),
            pl.BlockSpec((H2, n_out), lambda i: (0, 0)),
            pl.BlockSpec((1, n_out), lambda i: (0, 0)),
        ],
        out_specs=pl.BlockSpec((tb, n_out), lambda i: (i, 0)),
        compiler_params=pltpu.CompilerParams(
            dimension_semantics=("parallel",)),            # split batch tiles over TCs (v7x)
    )(x, w1, b1, w2, b2, w3, b3)

    return out[:B]


def init_params(key, input_dim):
    # Deterministic init mimicking nn.Linear's uniform(-1/sqrt(fan_in), 1/sqrt(fan_in)).
    dims = [(input_dim, 50), (50, 50), (50, 3)]
    params = []
    for i, (fan_in, fan_out) in enumerate(dims):
        kw, kb = jax.random.split(jax.random.fold_in(key, i))
        bound = 1.0 / jnp.sqrt(fan_in)
        # Stored already transposed: (in, out)
        w = jax.random.uniform(kw, (fan_in, fan_out), jnp.float32, -bound, bound)
        b = jax.random.uniform(kb, (1, fan_out), jnp.float32, -bound, bound)
        params += [w, b]
    return tuple(params)


def reference_forward(x, params):
    # Exact-math reference (softplus + tanh mish, exact divide).
    w1, b1, w2, b2, w3, b3 = params
    mish = lambda v: v * jnp.tanh(jnp.logaddexp(v, 0.0))
    h = mish(x @ w1 + b1)
    h = mish(h @ w2 + b2)
    logits = h @ w3 + b3
    return jax.nn.softmax(logits, axis=1)


if __name__ == "__main__":
    key = jax.random.PRNGKey(0)
    input_dim = 4          # Iris features
    batch = 64             # small demo batch; tb=32 exercises a multi-step grid

    kx, kp = jax.random.split(key)
    x = jax.random.normal(kx, (batch, input_dim), jnp.float32)
    params = init_params(kp, input_dim)

    out = jax.block_until_ready(mlp_forward(x, params, tb=32))
    ref = reference_forward(x, params)

    assert out.shape == (batch, 3)
    # approx-reciprocal mish/softmax introduces ~1e-3-level deviation vs exact math.
    assert jnp.allclose(out, ref, atol=2e-2), "mismatch vs reference"
    assert jnp.allclose(jnp.sum(out, axis=1), 1.0, atol=1e-2), "softmax rows must sum to ~1"
    assert jnp.all(jnp.argmax(out, axis=1) == jnp.argmax(ref, axis=1)), "class argmax mismatch"

    print("KERNEL_OK")
</pallas_src>

<mosaic_0001>
module attributes {stable_mosaic.version = 11 : i64} {
  func.func @mlp_kernel(%arg0: i32, %arg1: memref<32x4xf32, #tpu.memory_space<vmem>>, %arg2: memref<4x50xf32, #tpu.memory_space<vmem>>, %arg3: memref<1x50xf32, #tpu.memory_space<vmem>>, %arg4: memref<50x50xf32, #tpu.memory_space<vmem>>, %arg5: memref<1x50xf32, #tpu.memory_space<vmem>>, %arg6: memref<50x3xf32, #tpu.memory_space<vmem>>, %arg7: memref<1x3xf32, #tpu.memory_space<vmem>>, %arg8: memref<32x3xf32, #tpu.memory_space<vmem>>) attributes {dimension_semantics = [#tpu.dimension_semantics<parallel>], iteration_bounds = array<i64: 2>, scalar_prefetch = 0 : i64, scratch_operands = 0 : i64, tpu.core_type = #tpu.core_type<tc>, window_params = [{transform_indices = @transform_0, window_bounds = array<i64: 32, 4>}, {pipeline_mode = #tpu.pipeline_mode<synchronous>, transform_indices = @transform_1, window_bounds = array<i64: 4, 50>}, {pipeline_mode = #tpu.pipeline_mode<synchronous>, transform_indices = @transform_2, window_bounds = array<i64: 1, 50>}, {pipeline_mode = #tpu.pipeline_mode<synchronous>, transform_indices = @transform_3, window_bounds = array<i64: 50, 50>}, {pipeline_mode = #tpu.pipeline_mode<synchronous>, transform_indices = @transform_4, window_bounds = array<i64: 1, 50>}, {pipeline_mode = #tpu.pipeline_mode<synchronous>, transform_indices = @transform_5, window_bounds = array<i64: 50, 3>}, {pipeline_mode = #tpu.pipeline_mode<synchronous>, transform_indices = @transform_6, window_bounds = array<i64: 1, 3>}, {transform_indices = @transform_7, window_bounds = array<i64: 32, 3>}]} {
    %c0 = arith.constant 0 : index
    %c0_0 = arith.constant 0 : index
    %0 = vector.load %arg1[%c0, %c0_0] : memref<32x4xf32, #tpu.memory_space<vmem>>, vector<32x4xf32>
    %c0_1 = arith.constant 0 : index
    %c0_2 = arith.constant 0 : index
    %1 = vector.load %arg2[%c0_1, %c0_2] : memref<4x50xf32, #tpu.memory_space<vmem>>, vector<4x50xf32>
    %c0_3 = arith.constant 0 : index
    %c0_4 = arith.constant 0 : index
    %2 = vector.load %arg3[%c0_3, %c0_4] : memref<1x50xf32, #tpu.memory_space<vmem>>, vector<1x50xf32>
    %3 = vector.shape_cast %2 : vector<1x50xf32> to vector<1x50xf32>
    %4 = vector.broadcast %3 : vector<1x50xf32> to vector<32x50xf32>
    %5 = vector.extract_strided_slice %0 {offsets = [0, 0], sizes = [32, 1], strides = [1, 1]} : vector<32x4xf32> to vector<32x1xf32>
    %6 = vector.extract_strided_slice %1 {offsets = [0, 0], sizes = [1, 50], strides = [1, 1]} : vector<4x50xf32> to vector<1x50xf32>
    %7 = vector.broadcast %5 : vector<32x1xf32> to vector<32x50xf32>
    %8 = vector.broadcast %6 : vector<1x50xf32> to vector<32x50xf32>
    %9 = arith.mulf %7, %8 : vector<32x50xf32>
    %10 = arith.addf %4, %9 : vector<32x50xf32>
    %11 = vector.extract_strided_slice %0 {offsets = [0, 1], sizes = [32, 1], strides = [1, 1]} : vector<32x4xf32> to vector<32x1xf32>
    %12 = vector.extract_strided_slice %1 {offsets = [1, 0], sizes = [1, 50], strides = [1, 1]} : vector<4x50xf32> to vector<1x50xf32>
    %13 = vector.broadcast %11 : vector<32x1xf32> to vector<32x50xf32>
    %14 = vector.broadcast %12 : vector<1x50xf32> to vector<32x50xf32>
    %15 = arith.mulf %13, %14 : vector<32x50xf32>
    %16 = arith.addf %10, %15 : vector<32x50xf32>
    %17 = vector.extract_strided_slice %0 {offsets = [0, 2], sizes = [32, 1], strides = [1, 1]} : vector<32x4xf32> to vector<32x1xf32>
    %18 = vector.extract_strided_slice %1 {offsets = [2, 0], sizes = [1, 50], strides = [1, 1]} : vector<4x50xf32> to vector<1x50xf32>
    %19 = vector.broadcast %17 : vector<32x1xf32> to vector<32x50xf32>
    %20 = vector.broadcast %18 : vector<1x50xf32> to vector<32x50xf32>
    %21 = arith.mulf %19, %20 : vector<32x50xf32>
    %22 = arith.addf %16, %21 : vector<32x50xf32>
    %23 = vector.extract_strided_slice %0 {offsets = [0, 3], sizes = [32, 1], strides = [1, 1]} : vector<32x4xf32> to vector<32x1xf32>
    %24 = vector.extract_strided_slice %1 {offsets = [3, 0], sizes = [1, 50], strides = [1, 1]} : vector<4x50xf32> to vector<1x50xf32>
    %25 = vector.broadcast %23 : vector<32x1xf32> to vector<32x50xf32>
    %26 = vector.broadcast %24 : vector<1x50xf32> to vector<32x50xf32>
    %27 = arith.mulf %25, %26 : vector<32x50xf32>
    %28 = arith.addf %22, %27 : vector<32x50xf32>
    %cst = arith.constant -2.000000e+01 : f32
    %cst_5 = arith.constant 2.000000e+01 : f32
    %29 = vector.broadcast %cst : f32 to vector<32x50xf32>
    %30 = arith.maximumf %29, %28 : vector<32x50xf32>
    %31 = vector.broadcast %cst_5 : f32 to vector<32x50xf32>
    %32 = arith.minimumf %31, %30 : vector<32x50xf32>
    %33 = math.exp %32 : vector<32x50xf32>
    %cst_6 = arith.constant 2.000000e+00 : f32
    %34 = vector.broadcast %cst_6 : f32 to vector<32x50xf32>
    %35 = arith.addf %33, %34 : vector<32x50xf32>
    %36 = arith.mulf %33, %35 : vector<32x50xf32>
    %37 = arith.mulf %28, %36 : vector<32x50xf32>
    %cst_7 = arith.constant 2.000000e+00 : f32
    %38 = vector.broadcast %cst_7 : f32 to vector<32x50xf32>
    %39 = arith.addf %36, %38 : vector<32x50xf32>
    %40 = tpu.reciprocal %39 {approx = true} : vector<32x50xf32> -> vector<32x50xf32>
    %41 = arith.mulf %37, %40 : vector<32x50xf32>
    %c0_8 = arith.constant 0 : index
    %c0_9 = arith.constant 0 : index
    %42 = vector.load %arg4[%c0_8, %c0_9] : memref<50x50xf32, #tpu.memory_space<vmem>>, vector<50x50xf32>
    %cst_10 = arith.constant dense<0.000000e+00> : vector<32x50xf32>
    %43 = tpu.matmul %41, %42, %cst_10 {dimension_numbers = #tpu.dot_dimension_numbers<[1], [0], [0], [1], [0, 0, 1, 1], [], []>} : vector<32x50xf32>, vector<50x50xf32>, vector<32x50xf32> -> vector<32x50xf32>
    %c0_11 = arith.constant 0 : index
    %c0_12 = arith.constant 0 : index
    %44 = vector.load %arg5[%c0_11, %c0_12] : memref<1x50xf32, #tpu.memory_space<vmem>>, vector<1x50xf32>
    %45 = vector.broadcast %44 : vector<1x50xf32> to vector<32x50xf32>
    %46 = arith.addf %43, %45 : vector<32x50xf32>
    %cst_13 = arith.constant -2.000000e+01 : f32
    %cst_14 = arith.constant 2.000000e+01 : f32
    %47 = vector.broadcast %cst_13 : f32 to vector<32x50xf32>
    %48 = arith.maximumf %47, %46 : vector<32x50xf32>
    %49 = vector.broadcast %cst_14 : f32 to vector<32x50xf32>
    %50 = arith.minimumf %49, %48 : vector<32x50xf32>
    %51 = math.exp %50 : vector<32x50xf32>
    %cst_15 = arith.constant 2.000000e+00 : f32
    %52 = vector.broadcast %cst_15 : f32 to vector<32x50xf32>
    %53 = arith.addf %51, %52 : vector<32x50xf32>
    %54 = arith.mulf %51, %53 : vector<32x50xf32>
    %55 = arith.mulf %46, %54 : vector<32x50xf32>
    %cst_16 = arith.constant 2.000000e+00 : f32
    %56 = vector.broadcast %cst_16 : f32 to vector<32x50xf32>
    %57 = arith.addf %54, %56 : vector<32x50xf32>
    %58 = tpu.reciprocal %57 {approx = true} : vector<32x50xf32> -> vector<32x50xf32>
    %59 = arith.mulf %55, %58 : vector<32x50xf32>
    %c0_17 = arith.constant 0 : index
    %c0_18 = arith.constant 0 : index
    %60 = vector.load %arg6[%c0_17, %c0_18] : memref<50x3xf32, #tpu.memory_space<vmem>>, vector<50x3xf32>
    %cst_19 = arith.constant dense<0.000000e+00> : vector<32x3xf32>
    %61 = tpu.matmul %59, %60, %cst_19 {dimension_numbers = #tpu.dot_dimension_numbers<[1], [0], [0], [1], [0, 0, 1, 1], [], []>} : vector<32x50xf32>, vector<50x3xf32>, vector<32x3xf32> -> vector<32x3xf32>
    %c0_20 = arith.constant 0 : index
    %c0_21 = arith.constant 0 : index
    %62 = vector.load %arg7[%c0_20, %c0_21] : memref<1x3xf32, #tpu.memory_space<vmem>>, vector<1x3xf32>
    %63 = vector.broadcast %62 : vector<1x3xf32> to vector<32x3xf32>
    %64 = arith.addf %61, %63 : vector<32x3xf32>
    %cst_22 = arith.constant dense<0xFF800000> : vector<32xf32>
    %65 = vector.multi_reduction <maximumf>, %64, %cst_22 [1] : vector<32x3xf32> to vector<32xf32>
    %66 = vector.shape_cast %65 : vector<32xf32> to vector<32x1xf32>
    %67 = vector.broadcast %66 : vector<32x1xf32> to vector<32x3xf32>
    %68 = arith.subf %64, %67 : vector<32x3xf32>
    %69 = math.exp %68 : vector<32x3xf32>
    %cst_23 = arith.constant dense<0.000000e+00> : vector<32xf32>
    %70 = vector.multi_reduction <add>, %69, %cst_23 [1] : vector<32x3xf32> to vector<32xf32>
    %71 = vector.shape_cast %70 : vector<32xf32> to vector<32x1xf32>
    %72 = tpu.reciprocal %71 {approx = true} : vector<32x1xf32> -> vector<32x1xf32>
    %73 = vector.broadcast %72 : vector<32x1xf32> to vector<32x3xf32>
    %74 = arith.mulf %69, %73 : vector<32x3xf32>
    %c0_24 = arith.constant 0 : index
    %c0_25 = arith.constant 0 : index
    %75 = vector.load %arg8[%c0_24, %c0_25] : memref<32x3xf32, #tpu.memory_space<vmem>>, vector<32x3xf32>
    tpu.vector_store %arg8[%c0_24, %c0_25], %74 {strides = array<i32>} : memref<32x3xf32, #tpu.memory_space<vmem>>, vector<32x3xf32>,
    return
  }
  func.func @transform_0(%arg0: i32) -> (i32, i32) {
    %c0_i32 = arith.constant 0 : i32
    %c0_i32_0 = arith.constant 0 : i32
    return %arg0, %c0_i32 : i32, i32
  }
  func.func @transform_1(%arg0: i32) -> (i32, i32) {
    %c0_i32 = arith.constant 0 : i32
    %c0_i32_0 = arith.constant 0 : i32
    %c0_i32_1 = arith.constant 0 : i32
    return %c0_i32, %c0_i32_0 : i32, i32
  }
  func.func @transform_2(%arg0: i32) -> (i32, i32) {
    %c0_i32 = arith.constant 0 : i32
    %c0_i32_0 = arith.constant 0 : i32
    %c0_i32_1 = arith.constant 0 : i32
    return %c0_i32, %c0_i32_0 : i32, i32
  }
  func.func @transform_3(%arg0: i32) -> (i32, i32) {
    %c0_i32 = arith.constant 0 : i32
    %c0_i32_0 = arith.constant 0 : i32
    %c0_i32_1 = arith.constant 0 : i32
    return %c0_i32, %c0_i32_0 : i32, i32
  }
  func.func @transform_4(%arg0: i32) -> (i32, i32) {
    %c0_i32 = arith.constant 0 : i32
    %c0_i32_0 = arith.constant 0 : i32
    %c0_i32_1 = arith.constant 0 : i32
    return %c0_i32, %c0_i32_0 : i32, i32
  }
  func.func @transform_5(%arg0: i32) -> (i32, i32) {
    %c0_i32 = arith.constant 0 : i32
    %c0_i32_0 = arith.constant 0 : i32
    %c0_i32_1 = arith.constant 0 : i32
    return %c0_i32, %c0_i32_0 : i32, i32
  }
  func.func @transform_6(%arg0: i32) -> (i32, i32) {
    %c0_i32 = arith.constant 0 : i32
    %c0_i32_0 = arith.constant 0 : i32
    %c0_i32_1 = arith.constant 0 : i32
    return %c0_i32, %c0_i32_0 : i32, i32
  }
  func.func @transform_7(%arg0: i32) -> (i32, i32) {
    %c0_i32 = arith.constant 0 : i32
    %c0_i32_0 = arith.constant 0 : i32
    return %arg0, %c0_i32 : i32, i32
  }
}

</mosaic_0001>

<llo_original>
// kernel: tpu_custom_call.1
$region0: #{tpu_custom_call.1}
  #allocation0 [shape = 'u32[]', space=smem, size = 0x4, offset = 0x4, fixed_abs, tag = 'smem constant byte address 0x4 - core index']
  #allocation1 [shape = 'u32[144,128]{1,0:T(1,128)}', space=vmem, size = 0x12000, scoped, tag = 'internal scratch']
  %s0 = inlined_call_operand.vmem [shape: f32[64,4], index: 0, kind: input, shape index: {}]
  %s1 = inlined_call_operand.vmem [shape: f32[4,50], index: 1, kind: input, shape index: {}]
  %s2 = inlined_call_operand.vmem [shape: f32[1,50], index: 2, kind: input, shape index: {}]
  %s3 = inlined_call_operand.vmem [shape: f32[50,50], index: 3, kind: input, shape index: {}]
  %s4 = inlined_call_operand.vmem [shape: f32[1,50], index: 4, kind: input, shape index: {}]
  %s5 = inlined_call_operand.vmem [shape: f32[50,3], index: 5, kind: input, shape index: {}]
  %s6 = inlined_call_operand.vmem [shape: f32[1,3], index: 6, kind: input, shape index: {}]
  %s7 = inlined_call_operand.vmem [shape: f32[64,3], index: 7, kind: output, shape index: {}]
  %s8 = sld [smem:[#allocation0]]
  $region61: #{tpu_custom_call.1} parent=0
    _
  %s10 = ssub.s32 1, %s8
  %s11 = scalar_select 0, %s10, %s8
  loop: start=0, step=1, limit=4
  $region2: #{tpu_custom_call.1} parent=0 // loop_pre_header
    _
  $region3: #{tpu_custom_call.1} parent=0 // loop_header
    %s13 = sphi 0, %s17
    %p14 = scmp.ge.s32.totalorder %s13, 4
    %s23 = sphi 0, %s25
    %s26 = sphi 0, %s23
    %s27 = sphi 0, %s26
    %s43 = sphi 0, %s27
    %s47 = sphi 0, %s47
    %s49 = sphi 0, %s47
    %s50 = sphi 0, %s49
    %s64 = sphi 0, %s50
    %s68 = sphi 0, %s68
    %s70 = sphi 0, %s68
    %s71 = sphi 0, %s70
    %s85 = sphi 0, %s71
    %s89 = sphi 0, %s89
    %s91 = sphi 0, %s89
    %s92 = sphi 0, %s91
    %s106 = sphi 0, %s92
    %s110 = sphi 0, %s110
    %s112 = sphi 0, %s110
    %s113 = sphi 0, %s112
    %s127 = sphi 0, %s113
    %s131 = sphi 0, %s131
    %s133 = sphi 0, %s131
    %s134 = sphi 0, %s133
    %s148 = sphi 0, %s134
    %s152 = sphi 0, %s152
    %s154 = sphi 0, %s152
    %s155 = sphi 0, %s154
    %s169 = sphi 0, %s155
    %s175 = sphi 0, %s177
    %s178 = sphi 0, %s175
    %s179 = sphi 0, %s178
    %s195 = sphi 0, %s179
  $region4: #{tpu_custom_call.1} parent=0 // loop_header_branch
    %16 = sbr.rel (%p14) target = $region8
  $region5: #{tpu_custom_call.1} parent=0 // loop_body
    %s18 = ssub.s32 %s13, 1
    %s19 = ssub.s32 %s13, 2
    %s20 = sadd.s32 %s13, 1
    %s21 = ssub.s32 %s13, %s20
    %p22 = scmp.eq.s32.totalorder %s21, 0
    %s24 = sadd.s32 %s23, 1
    %s25 = scalar_select %p22, %s23, %s24
    %p28 = pneg %p22
    %p29 = scmp.eq.s32.totalorder %s13, 1
    %p30 = por %p28, %p29
    %p31 = scmp.ne.s32.totalorder %s23, %s26
    %p32 = scmp.eq.s32.totalorder %s13, 0
    %p33 = por %p31, %p32
    %p34 = scmp.ne.s32.totalorder %s23, %s26
    %p35 = scmp.eq.s32.totalorder %s18, 1
    %p36 = por %p34, %p35
    %p37 = scmp.ne.s32.totalorder %s26, %s27
    %p38 = scmp.eq.s32.totalorder %s18, 0
    %p39 = por %p37, %p38
    %p40 = scmp.ne.s32.totalorder %s26, %s27
    %p41 = scmp.eq.s32.totalorder %s19, 1
    %p42 = por %p40, %p41
    %p44 = scmp.ne.s32.totalorder %s27, %s43
    %p45 = scmp.eq.s32.totalorder %s19, 0
    %p46 = por %p44, %p45
    %s48 = sadd.s32 %s47, 1
    %p51 = scmp.eq.s32.totalorder %s13, 1
    %p52 = scmp.ne.s32.totalorder %s47, %s49
    %p53 = scmp.eq.s32.totalorder %s13, 0
    %p54 = por %p52, %p53
    %p55 = scmp.ne.s32.totalorder %s47, %s49
    %p56 = scmp.eq.s32.totalorder %s18, 1
    %p57 = por %p55, %p56
    %p58 = scmp.ne.s32.totalorder %s49, %s50
    %p59 = scmp.eq.s32.totalorder %s18, 0
    %p60 = por %p58, %p59
    %p61 = scmp.ne.s32.totalorder %s49, %s50
    %p62 = scmp.eq.s32.totalorder %s19, 1
    %p63 = por %p61, %p62
    %p65 = scmp.ne.s32.totalorder %s50, %s64
    %p66 = scmp.eq.s32.totalorder %s19, 0
    %p67 = por %p65, %p66
    %s69 = sadd.s32 %s68, 1
    %p72 = scmp.eq.s32.totalorder %s13, 1
    %p73 = scmp.ne.s32.totalorder %s68, %s70
    %p74 = scmp.eq.s32.totalorder %s13, 0
    %p75 = por %p73, %p74
    %p76 = scmp.ne.s32.totalorder %s68, %s70
    %p77 = scmp.eq.s32.totalorder %s18, 1
    %p78 = por %p76, %p77
    %p79 = scmp.ne.s32.totalorder %s70, %s71
    %p80 = scmp.eq.s32.totalorder %s18, 0
    %p81 = por %p79, %p80
    %p82 = scmp.ne.s32.totalorder %s70, %s71
    %p83 = scmp.eq.s32.totalorder %s19, 1
    %p84 = por %p82, %p83
    %p86 = scmp.ne.s32.totalorder %s71, %s85
    %p87 = scmp.eq.s32.totalorder %s19, 0
    %p88 = por %p86, %p87
    %s90 = sadd.s32 %s89, 1
    %p93 = scmp.eq.s32.totalorder %s13, 1
    %p94 = scmp.ne.s32.totalorder %s89, %s91
    %p95 = scmp.eq.s32.totalorder %s13, 0
    %p96 = por %p94, %p95
    %p97 = scmp.ne.s32.totalorder %s89, %s91
    %p98 = scmp.eq.s32.totalorder %s18, 1
    %p99 = por %p97, %p98
    %p100 = scmp.ne.s32.totalorder %s91, %s92
    %p101 = scmp.eq.s32.totalorder %s18, 0
    %p102 = por %p100, %p101
    %p103 = scmp.ne.s32.totalorder %s91, %s92
    %p104 = scmp.eq.s32.totalorder %s19, 1
    %p105 = por %p103, %p104
    %p107 = scmp.ne.s32.totalorder %s92, %s106
    %p108 = scmp.eq.s32.totalorder %s19, 0
    %p109 = por %p107, %p108
    %s111 = sadd.s32 %s110, 1
    %p114 = scmp.eq.s32.totalorder %s13, 1
    %p115 = scmp.ne.s32.totalorder %s110, %s112
    %p116 = scmp.eq.s32.totalorder %s13, 0
    %p117 = por %p115, %p116
    %p118 = scmp.ne.s32.totalorder %s110, %s112
    %p119 = scmp.eq.s32.totalorder %s18, 1
    %p120 = por %p118, %p119
    %p121 = scmp.ne.s32.totalorder %s112, %s113
    %p122 = scmp.eq.s32.totalorder %s18, 0
    %p123 = por %p121, %p122
    %p124 = scmp.ne.s32.totalorder %s112, %s113
    %p125 = scmp.eq.s32.totalorder %s19, 1
    %p126 = por %p124, %p125
    %p128 = scmp.ne.s32.totalorder %s113, %s127
    %p129 = scmp.eq.s32.totalorder %s19, 0
    %p130 = por %p128, %p129
    %s132 = sadd.s32 %s131, 1
    %p135 = scmp.eq.s32.totalorder %s13, 1
    %p136 = scmp.ne.s32.totalorder %s131, %s133
    %p137 = scmp.eq.s32.totalorder %s13, 0
    %p138 = por %p136, %p137
    %p139 = scmp.ne.s32.totalorder %s131, %s133
    %p140 = scmp.eq.s32.totalorder %s18, 1
    %p141 = por %p139, %p140
    %p142 = scmp.ne.s32.totalorder %s133, %s134
    %p143 = scmp.eq.s32.totalorder %s18, 0
    %p144 = por %p142, %p143
    %p145 = scmp.ne.s32.totalorder %s133, %s134
    %p146 = scmp.eq.s32.totalorder %s19, 1
    %p147 = por %p145, %p146
    %p149 = scmp.ne.s32.totalorder %s134, %s148
    %p150 = scmp.eq.s32.totalorder %s19, 0
    %p151 = por %p149, %p150
    %s153 = sadd.s32 %s152, 1
    %p156 = scmp.eq.s32.totalorder %s13, 1
    %p157 = scmp.ne.s32.totalorder %s152, %s154
    %p158 = scmp.eq.s32.totalorder %s13, 0
    %p159 = por %p157, %p158
    %p160 = scmp.ne.s32.totalorder %s152, %s154
    %p161 = scmp.eq.s32.totalorder %s18, 1
    %p162 = por %p160, %p161
    %p163 = scmp.ne.s32.totalorder %s154, %s155
    %p164 = scmp.eq.s32.totalorder %s18, 0
    %p165 = por %p163, %p164
    %p166 = scmp.ne.s32.totalorder %s154, %s155
    %p167 = scmp.eq.s32.totalorder %s19, 1
    %p168 = por %p166, %p167
    %p170 = scmp.ne.s32.totalorder %s155, %s169
    %p171 = scmp.eq.s32.totalorder %s19, 0
    %p172 = por %p170, %p171
    %s173 = ssub.s32 %s13, %s20
    %p174 = scmp.eq.s32.totalorder %s173, 0
    %s176 = sadd.s32 %s175, 1
    %s177 = scalar_select %p174, %s175, %s176
    %p180 = pneg %p174
    %p181 = scmp.eq.s32.totalorder %s13, 1
    %p182 = por %p180, %p181
    %p183 = scmp.ne.s32.totalorder %s175, %s178
    %p184 = scmp.eq.s32.totalorder %s13, 0
    %p185 = por %p183, %p184
    %p186 = scmp.ne.s32.totalorder %s175, %s178
    %p187 = scmp.eq.s32.totalorder %s18, 1
    %p188 = por %p186, %p187
    %p189 = scmp.ne.s32.totalorder %s178, %s179
    %p190 = scmp.eq.s32.totalorder %s18, 0
    %p191 = por %p189, %p190
    %p192 = scmp.ne.s32.totalorder %s178, %s179
    %p193 = scmp.eq.s32.totalorder %s19, 1
    %p194 = por %p192, %p193
    %p196 = scmp.ne.s32.totalorder %s179, %s195
    %p197 = scmp.eq.s32.totalorder %s19, 0
    %p198 = por %p196, %p197
    %p199 = scmp.le.s32.totalorder 1, %s13
    %p200 = scmp.lt.s32.totalorder %s13, 3
    %p201 = pnand %p199, %p200
    %p202 = pneg %p201
    // Predicated region
    $region9: #{tpu_custom_call.1} parent=5 // pred_check
      _
    $region10: #{tpu_custom_call.1} parent=5 // pred_check_branch
      %204 = sbr.rel (%p201) target = $region12
    $region11: #{tpu_custom_call.1} parent=5 // pred_region
      %s205 = ssub.s32 %s13, 1
      // Predicated region
      $region13: #{tpu_custom_call.1} parent=11 // pred_check
        %p206 = pneg %p60
      $region14: #{tpu_custom_call.1} parent=11 // pred_check_branch
        %208 = sbr.rel (%p206) target = $region16
      $region15: #{tpu_custom_call.1} parent=11 // pred_region
        _
      $region16: #{tpu_custom_call.1} parent=11 // pred_fallthru
        _
      // Predicated region
      $region17: #{tpu_custom_call.1} parent=11 // pred_check
        %p209 = pneg %p81
      $region18: #{tpu_custom_call.1} parent=11 // pred_check_branch
        %211 = sbr.rel (%p209) target = $region20
      $region19: #{tpu_custom_call.1} parent=11 // pred_region
        _
      $region20: #{tpu_custom_call.1} parent=11 // pred_fallthru
        _
      // Predicated region
      $region21: #{tpu_custom_call.1} parent=11 // pred_check
        %p212 = pneg %p102
      $region22: #{tpu_custom_call.1} parent=11 // pred_check_branch
        %214 = sbr.rel (%p212) target = $region24
      $region23: #{tpu_custom_call.1} parent=11 // pred_region
        _
      $region24: #{tpu_custom_call.1} parent=11 // pred_fallthru
        _
      // Predicated region
      $region25: #{tpu_custom_call.1} parent=11 // pred_check
        %p215 = pneg %p123
      $region26: #{tpu_custom_call.1} parent=11 // pred_check_branch
        %217 = sbr.rel (%p215) target = $region28
      $region27: #{tpu_custom_call.1} parent=11 // pred_region
        _
      $region28: #{tpu_custom_call.1} parent=11 // pred_fallthru
        _
      // Predicated region
      $region29: #{tpu_custom_call.1} parent=11 // pred_check
        %p218 = pneg %p144
      $region30: #{tpu_custom_call.1} parent=11 // pred_check_branch
        %220 = sbr.rel (%p218) target = $region32
      $region31: #{tpu_custom_call.1} parent=11 // pred_region
        _
      $region32: #{tpu_custom_call.1} parent=11 // pred_fallthru
        _
      // Predicated region
      $region33: #{tpu_custom_call.1} parent=11 // pred_check
        %p221 = pneg %p165
      $region34: #{tpu_custom_call.1} parent=11 // pred_check_branch
        %223 = sbr.rel (%p221) target = $region36
      $region35: #{tpu_custom_call.1} parent=11 // pred_region
        _
      $region36: #{tpu_custom_call.1} parent=11 // pred_fallthru
        _
    $region12: #{tpu_custom_call.1} parent=5 // pred_fallthru
      _
    %p224 = scmp.lt.s32.totalorder %s13, 2
    // Predicated region
    $region37: #{tpu_custom_call.1} parent=5 // pred_check
      %p225 = pneg %p224
    $region38: #{tpu_custom_call.1} parent=5 // pred_check_branch
      %227 = sbr.rel (%p225) target = $region40
    $region39: #{tpu_custom_call.1} parent=5 // pred_region
      // Predicated region
      $region41: #{tpu_custom_call.1} parent=39 // pred_check
        %p228 = pneg %p33
      $region42: #{tpu_custom_call.1} parent=39 // pred_check_branch
        %230 = sbr.rel (%p228) target = $region44
      $region43: #{tpu_custom_call.1} parent=39 // pred_region
        %s231 = smul.u32 4, %s13
        %p232 = scmp.lt.s32.totalorder %s231, 7
        %s233 = scalar_select %p232, %s231, 7
        %s234 = smul.addr %s233, 8
        %s235 = scalar_lea.vmem %s0, %s234
        %s236 = smul.u32 4, %s13
      $region44: #{tpu_custom_call.1} parent=39 // pred_fallthru
        _
    $region40: #{tpu_custom_call.1} parent=5 // pred_fallthru
      _
    %p237 = scmp.le.s32.totalorder 1, %s13
    %p238 = scmp.lt.s32.totalorder %s13, 3
    %p239 = pnand %p237, %p238
    %p240 = pneg %p239
    // Predicated region
    $region45: #{tpu_custom_call.1} parent=5 // pred_check
      _
    $region46: #{tpu_custom_call.1} parent=5 // pred_check_branch
      %242 = sbr.rel (%p239) target = $region48
    $region47: #{tpu_custom_call.1} parent=5 // pred_region
      %s243 = ssub.s32 %s13, 1
      %s244 = smul.u32 4, %s18
      %p245 = scmp.lt.s32.totalorder %s244, 7
      %s246 = scalar_select %p245, %s244, 7
      %s247 = smul.addr %s246, 8
      %s248 = scalar_lea.vmem %s0, %s247
      %p249 = pneg %p39
      %p250 = pneg %p36
      %p251 = pneg %p60
      %p252 = pneg %p57
      %p253 = pneg %p81
      %p254 = pneg %p78
      %p255 = pneg %p102
      %p256 = pneg %p99
      %p257 = pneg %p123
      %p258 = pneg %p120
      %p259 = pneg %p144
      %p260 = pneg %p141
      %p261 = pneg %p165
      %p262 = pneg %p162
      %p263 = pneg %p191
      %p264 = pneg %p188
      %s265 = smul.u32 4, %s18
      %p266 = scmp.lt.s32.totalorder %s265, 7
      %s267 = scalar_select %p266, %s265, 7
      %s268 = smul.addr %s267, 8
      %s269 = scalar_lea.vmem %s7, %s268
      %s270 = smul.u32 4, %s18
      %p271 = scmp.lt.s32.totalorder %s270, 7
      %s272 = scalar_select %p271, %s270, 7
      %s273 = smul.addr %s272, 8
      %s274 = scalar_lea.vmem %s0, %s273
      %s275 = smul.u32 4, %s18
      %s276 = smul.u32 4, %s18
      %p277 = scmp.lt.s32.totalorder %s276, 7
      %s278 = scalar_select %p277, %s276, 7
      %s279 = smul.addr %s278, 8
      %s280 = scalar_lea.vmem %s7, %s279
      %s281 = smul.u32 4, %s18
      %v282 = vld [vmem:[%s274] sm:$0xff]
      %v283 = vld [vmem:[%s274 + $0x8] sm:$0xff]
      %v284 = vld [vmem:[%s274 + $0x10] sm:$0xff]
      %v285 = vld [vmem:[%s274 + $0x18] sm:$0xff]
      %v286 = vld [vmem:[%s1] sm:$0xf]
      %v287 = vld [vmem:[%s2] sm:$0x1]
      %v289 = vlaneseq
      %v290 = vshrl.u32 %v289, 7
      %v291 = vsub.s32 0, %v290
      %v292 = vrot.slane %v287, %v291
      %295 = vset.pattern.permute.xlu0 0
      %296 = vperm.xlu0 %295, %v282
      %v297 = vpop.permute.xlu0 %296
      %300 = vset.pattern.permute.xlu0 0
      %301 = vperm.xlu0 %300, %v283
      %v302 = vpop.permute.xlu0 %301
      %305 = vset.pattern.permute.xlu0 0
      %306 = vperm.xlu0 %305, %v284
      %v307 = vpop.permute.xlu0 %306
      %310 = vset.pattern.permute.xlu0 0
      %311 = vperm.xlu0 %310, %v285
      %v312 = vpop.permute.xlu0 %311
      %v314 = vlaneseq
      %v315 = vshrl.u32 %v314, 7
      %v316 = vsub.s32 0, %v315
      %v317 = vrot.slane %v286, %v316
      %v318 = vmul.f32 %v297, %v317
      %v319 = vmul.f32 %v302, %v317
      %v320 = vmul.f32 %v307, %v317
      %v321 = vmul.f32 %v312, %v317
      %v322 = vadd.f32 %v292, %v318
      %v323 = vadd.f32 %v292, %v319
      %v324 = vadd.f32 %v292, %v320
      %v325 = vadd.f32 %v292, %v321
      %326 = vset.pattern.permute.xlu0 1
      %327 = vperm.xlu0 %326, %v282
      %v328 = vpop.permute.xlu0 %327
      %330 = vset.pattern.permute.xlu0 1
      %331 = vperm.xlu0 %330, %v283
      %v332 = vpop.permute.xlu0 %331
      %334 = vset.pattern.permute.xlu0 1
      %335 = vperm.xlu0 %334, %v284
      %v336 = vpop.permute.xlu0 %335
      %338 = vset.pattern.permute.xlu0 1
      %339 = vperm.xlu0 %338, %v285
      %v340 = vpop.permute.xlu0 %339
      %v342 = vlaneseq
      %v343 = vshrl.u32 %v342, 7
      %v344 = vsub.s32 1, %v343
      %v345 = vrot.slane %v286, %v344
      %v346 = vmul.f32 %v328, %v345
      %v347 = vmul.f32 %v332, %v345
      %v348 = vmul.f32 %v336, %v345
      %v349 = vmul.f32 %v340, %v345
      %v350 = vadd.f32 %v322, %v346
      %v351 = vadd.f32 %v323, %v347
      %v352 = vadd.f32 %v324, %v348
      %v353 = vadd.f32 %v325, %v349
      %354 = vset.pattern.permute.xlu0 2
      %355 = vperm.xlu0 %354, %v282
      %v356 = vpop.permute.xlu0 %355
      %358 = vset.pattern.permute.xlu0 2
      %359 = vperm.xlu0 %358, %v283
      %v360 = vpop.permute.xlu0 %359
      %362 = vset.pattern.permute.xlu0 2
      %363 = vperm.xlu0 %362, %v284
      %v364 = vpop.permute.xlu0 %363
      %366 = vset.pattern.permute.xlu0 2
      %367 = vperm.xlu0 %366, %v285
      %v368 = vpop.permute.xlu0 %367
      %v370 = vlaneseq
      %v371 = vshrl.u32 %v370, 7
      %v372 = vsub.s32 2, %v371
      %v373 = vrot.slane %v286, %v372
      %v374 = vmul.f32 %v356, %v373
      %v375 = vmul.f32 %v360, %v373
      %v376 = vmul.f32 %v364, %v373
      %v377 = vmul.f32 %v368, %v373
      %v378 = vadd.f32 %v350, %v374
      %v379 = vadd.f32 %v351, %v375
      %v380 = vadd.f32 %v352, %v376
      %v381 = vadd.f32 %v353, %v377
      %382 = vset.pattern.permute.xlu0 3
      %383 = vperm.xlu0 %382, %v282
      %v384 = vpop.permute.xlu0 %383
      %386 = vset.pattern.permute.xlu0 3
      %387 = vperm.xlu0 %386, %v283
      %v388 = vpop.permute.xlu0 %387
      %390 = vset.pattern.permute.xlu0 3
      %391 = vperm.xlu0 %390, %v284
      %v392 = vpop.permute.xlu0 %391
      %394 = vset.pattern.permute.xlu0 3
      %395 = vperm.xlu0 %394, %v285
      %v396 = vpop.permute.xlu0 %395
      %v398 = vlaneseq
      %v399 = vshrl.u32 %v398, 7
      %v400 = vsub.s32 3, %v399
      %v401 = vrot.slane %v286, %v400
      %v402 = vmul.f32 %v384, %v401
      %v403 = vmul.f32 %v388, %v401
      %v404 = vmul.f32 %v392, %v401
      %v405 = vmul.f32 %v396, %v401
      %v406 = vadd.f32 %v378, %v402
      %v407 = vadd.f32 %v379, %v403
      %v408 = vadd.f32 %v380, %v404
      %v409 = vadd.f32 %v381, %v405
      %v410 = vmax.f32 %v406, -20.0
      %v411 = vmax.f32 %v407, -20.0
      %v412 = vmax.f32 %v408, -20.0
      %v413 = vmax.f32 %v409, -20.0
      %v414 = vmin.f32 %v410, 20.0
      %v415 = vmin.f32 %v411, 20.0
      %v416 = vmin.f32 %v412, 20.0
      %v417 = vmin.f32 %v413, 20.0
      %v418 = vmul.f32 %v414, 1.442695
      %v419 = vpow.pop %v418
      %v420 = vmul.f32 %v415, 1.442695
      %v421 = vpow.pop %v420
      %v422 = vmul.f32 %v416, 1.442695
      %v423 = vpow.pop %v422
      %v424 = vmul.f32 %v417, 1.442695
      %v425 = vpow.pop %v424
      %v426 = vadd.f32 %v419, 2.0
      %v427 = vadd.f32 %v421, 2.0
      %v428 = vadd.f32 %v423, 2.0
      %v429 = vadd.f32 %v425, 2.0
      %v430 = vmul.f32 %v419, %v426
      %v431 = vmul.f32 %v421, %v427
      %v432 = vmul.f32 %v423, %v428
      %v433 = vmul.f32 %v425, %v429
      %v434 = vmul.f32 %v406, %v430
      %v435 = vmul.f32 %v407, %v431
      %v436 = vmul.f32 %v408, %v432
      %v437 = vmul.f32 %v409, %v433
      %v438 = vadd.f32 %v430, 2.0
      %v439 = vadd.f32 %v431, 2.0
      %v440 = vadd.f32 %v432, 2.0
      %v441 = vadd.f32 %v433, 2.0
      %v442 = vrcp.pop %v438
      %v443 = vrcp.pop %v439
      %v444 = vrcp.pop %v440
      %v445 = vrcp.pop %v441
      %v446 = vmul.f32 %v434, %v442
      %v447 = vmul.f32 %v435, %v443
      %v448 = vmul.f32 %v436, %v444
      %v449 = vmul.f32 %v437, %v445
      %v450 = vld [vmem:[%s3] sm:$0xff]
      %v451 = vld [vmem:[%s3 + $0x8] sm:$0xff]
      %v452 = vld [vmem:[%s3 + $0x10] sm:$0xff]
      %v453 = vld [vmem:[%s3 + $0x18] sm:$0xff]
      %v454 = vld [vmem:[%s3 + $0x20] sm:$0xff]
      %v455 = vld [vmem:[%s3 + $0x28] sm:$0xff]
      %v456 = vld [vmem:[%s3 + $0x30] sm:$0x3]
      %v457 = vld [vmem:[%s4] sm:$0x1]
      %v459 = vlaneseq
      %v460 = vshrl.u32 %v459, 7
      %v461 = vsub.s32 0, %v460
      %v462 = vrot.slane %v457, %v461
      %vm464 = vcmask 408576
      %v466 = vsel %vm464, %v446, 0
      %v469 = vsel %vm464, %v447, 0
      %v472 = vsel %vm464, %v448, 0
      %v475 = vsel %vm464, %v449, 0
      %vm477 = vcmask 1041408
      %v479 = vsel %vm477, %v456, 0
      %481 = vmatprep.subr.mxu0 0.0
      %482 = vmatpush1.msra.mxu0 %v450
      %483 = vmatprep.subr.mxu0 0.0
      %484 = vmatpush1.msra.mxu0 %v451
      %485 = vmatprep.subr.mxu0 0.0
      %486 = vmatpush1.msra.mxu0 %v452
      %487 = vmatprep.subr.mxu0 0.0
      %488 = vmatpush1.msra.mxu0 %v453
      %489 = vmatprep.subr.mxu0 0.0
      %490 = vmatpush1.msra.mxu0 %v454
      %491 = vmatprep.subr.mxu0 0.0
      %492 = vmatpush1.msra.mxu0 %v455
      %493 = vmatprep.subr.mxu0 0.0
      %494 = vmatpush1.msra.mxu0 %v479
      %495 = vmatprep.subr.mxu0 0.0
      %496 = vmatpush1.msra.mxu0 0.0
      %497 = vmatprep.subr.mxu0 0.0
      %498 = vmatpush1.msra.mxu0 0.0
      %499 = vmatprep.subr.mxu0 0.0
      %500 = vmatpush1.msra.mxu0 0.0
      %501 = vmatprep.subr.mxu0 0.0
      %502 = vmatpush1.msra.mxu0 0.0
      %503 = vmatprep.subr.mxu0 0.0
      %504 = vmatpush1.msra.mxu0 0.0
      %505 = vmatprep.subr.mxu0 0.0
      %506 = vmatpush1.msra.mxu0 0.0
      %507 = vmatprep.subr.mxu0 0.0
      %508 = vmatpush1.msra.mxu0 0.0
      %509 = vmatprep.subr.mxu0 0.0
      %510 = vmatpush1.msra.mxu0 0.0
      %511 = vmatprep.subr.mxu0 0.0
      %512 = vmatpush1.msra.mxu0 0.0
      %513 = vmatprep.subr.mxu0 0.0
      %514 = vmatpush1.msra.mxu0 0.0
      %515 = vmatprep.subr.mxu0 0.0
      %516 = vmatpush1.msra.mxu0 0.0
      %517 = vmatprep.subr.mxu0 0.0
      %518 = vmatpush1.msra.mxu0 0.0
      %519 = vmatprep.subr.mxu0 0.0
      %520 = vmatpush1.msra.mxu0 0.0
      %521 = vmatprep.subr.mxu0 0.0
      %522 = vmatpush1.msra.mxu0 0.0
      %523 = vmatprep.subr.mxu0 0.0
      %524 = vmatpush1.msra.mxu0 0.0
      %525 = vmatprep.subr.mxu0 0.0
      %526 = vmatpush1.msra.mxu0 0.0
      %527 = vmatprep.subr.mxu0 0.0
      %528 = vmatpush1.msra.mxu0 0.0
      %529 = vmatprep.subr.mxu0 0.0
      %530 = vmatpush1.msra.mxu0 0.0
      %531 = vmatprep.subr.mxu0 0.0
      %532 = vmatpush1.msra.mxu0 0.0
      %533 = vmatprep.subr.mxu0 0.0
      %534 = vmatpush1.msra.mxu0 0.0
      %535 = vmatprep.subr.mxu0 0.0
      %536 = vmatpush1.msra.mxu0 0.0
      %537 = vmatprep.subr.mxu0 0.0
      %538 = vmatpush1.msra.mxu0 0.0
      %539 = vmatprep.subr.mxu0 0.0
      %540 = vmatpush1.msra.mxu0 0.0
      %541 = vmatprep.subr.mxu0 0.0
      %542 = vmatpush1.msra.mxu0 0.0
      %543 = vmatprep.subr.mxu0 0.0
      %544 = vmatpush1.msra.mxu0 0.0
      %545 = vmatprep.mubr.f32.mxu0 0.0
      %546 = vmatmul.mubr.f32.gmra.mrb[0].mxu0 %v466
      %v547 = vpop.f32.mrb[0].mxu0
      %v548 = vadd.f32 %v462, %v547
      %v549 = vpop.f32.mrb[0].mxu0
      %550 = vmatprep.mubr.f32.mxu0 0.0
      %551 = vmatmul.mubr.f32.gmra.mrb[0].mxu0 %v469
      %v552 = vpop.f32.mrb[0].mxu0
      %v553 = vadd.f32 %v462, %v552
      %v554 = vpop.f32.mrb[0].mxu0
      %555 = vmatprep.mubr.f32.mxu0 0.0
      %556 = vmatmul.mubr.f32.gmra.mrb[0].mxu0 %v472
      %v557 = vpop.f32.mrb[0].mxu0
      %v558 = vadd.f32 %v462, %v557
      %v559 = vpop.f32.mrb[0].mxu0
      %560 = vmatprep.mubr.f32.mxu0 0.0
      %561 = vmatmul.mubr.f32.gmra.mrb[0].mxu0 %v475
      %v562 = vpop.f32.mrb[0].mxu0
      %v563 = vadd.f32 %v462, %v562
      %v564 = vpop.f32.mrb[0].mxu0
      %565 = vdwg.mxu0
      %v566 = vmax.f32 %v548, -20.0
      %v567 = vmax.f32 %v553, -20.0
      %v568 = vmax.f32 %v558, -20.0
      %v569 = vmax.f32 %v563, -20.0
      %v570 = vmin.f32 %v566, 20.0
      %v571 = vmin.f32 %v567, 20.0
      %v572 = vmin.f32 %v568, 20.0
      %v573 = vmin.f32 %v569, 20.0
      %v574 = vmul.f32 %v570, 1.442695
      %v575 = vpow.pop %v574
      %v576 = vmul.f32 %v571, 1.442695
      %v577 = vpow.pop %v576
      %v578 = vmul.f32 %v572, 1.442695
      %v579 = vpow.pop %v578
      %v580 = vmul.f32 %v573, 1.442695
      %v581 = vpow.pop %v580
      %v582 = vadd.f32 %v575, 2.0
      %v583 = vadd.f32 %v577, 2.0
      %v584 = vadd.f32 %v579, 2.0
      %v585 = vadd.f32 %v581, 2.0
      %v586 = vmul.f32 %v575, %v582
      %v587 = vmul.f32 %v577, %v583
      %v588 = vmul.f32 %v579, %v584
      %v589 = vmul.f32 %v581, %v585
      %v590 = vmul.f32 %v548, %v586
      %v591 = vmul.f32 %v553, %v587
      %v592 = vmul.f32 %v558, %v588
      %v593 = vmul.f32 %v563, %v589
      %v594 = vadd.f32 %v586, 2.0
      %v595 = vadd.f32 %v587, 2.0
      %v596 = vadd.f32 %v588, 2.0
      %v597 = vadd.f32 %v589, 2.0
      %v598 = vrcp.pop %v594
      %v599 = vrcp.pop %v595
      %v600 = vrcp.pop %v596
      %v601 = vrcp.pop %v597
      %v602 = vmul.f32 %v590, %v598
      %v603 = vmul.f32 %v591, %v599
      %v604 = vmul.f32 %v592, %v600
      %v605 = vmul.f32 %v593, %v601
      %v606 = vld [vmem:[%s5] sm:$0xff]
      %v607 = vld [vmem:[%s5 + $0x8] sm:$0xff]
      %v608 = vld [vmem:[%s5 + $0x10] sm:$0xff]
      %v609 = vld [vmem:[%s5 + $0x18] sm:$0xff]
      %v610 = vld [vmem:[%s5 + $0x20] sm:$0xff]
      %v611 = vld [vmem:[%s5 + $0x28] sm:$0xff]
      %v612 = vld [vmem:[%s5 + $0x30] sm:$0x3]
      %v613 = vld [vmem:[%s6] sm:$0x1]
      %v615 = vlaneseq
      %v616 = vshrl.u32 %v615, 7
      %v617 = vsub.s32 0, %v616
      %v618 = vrot.slane %v613, %v617
      %v621 = vsel %vm464, %v602, 0
      %v624 = vsel %vm464, %v603, 0
      %v627 = vsel %vm464, %v604, 0
      %v630 = vsel %vm464, %v605, 0
      %v633 = vsel %vm477, %v612, 0
      %635 = vmatprep.subr.mxu0 0.0
      %636 = vmatpush1.msra.mxu0 %v606
      %637 = vmatprep.subr.mxu0 0.0
      %638 = vmatpush1.msra.mxu0 %v607
      %639 = vmatprep.subr.mxu0 0.0
      %640 = vmatpush1.msra.mxu0 %v608
      %641 = vmatprep.subr.mxu0 0.0
      %642 = vmatpush1.msra.mxu0 %v609
      %643 = vmatprep.subr.mxu0 0.0
      %644 = vmatpush1.msra.mxu0 %v610
      %645 = vmatprep.subr.mxu0 0.0
      %646 = vmatpush1.msra.mxu0 %v611
      %647 = vmatprep.subr.mxu0 0.0
      %648 = vmatpush1.msra.mxu0 %v633
      %649 = vmatprep.subr.mxu0 0.0
      %650 = vmatpush1.msra.mxu0 0.0
      %651 = vmatprep.subr.mxu0 0.0
      %652 = vmatpush1.msra.mxu0 0.0
      %653 = vmatprep.subr.mxu0 0.0
      %654 = vmatpush1.msra.mxu0 0.0
      %655 = vmatprep.subr.mxu0 0.0
      %656 = vmatpush1.msra.mxu0 0.0
      %657 = vmatprep.subr.mxu0 0.0
      %658 = vmatpush1.msra.mxu0 0.0
      %659 = vmatprep.subr.mxu0 0.0
      %660 = vmatpush1.msra.mxu0 0.0
      %661 = vmatprep.subr.mxu0 0.0
      %662 = vmatpush1.msra.mxu0 0.0
      %663 = vmatprep.subr.mxu0 0.0
      %664 = vmatpush1.msra.mxu0 0.0
      %665 = vmatprep.subr.mxu0 0.0
      %666 = vmatpush1.msra.mxu0 0.0
      %667 = vmatprep.subr.mxu0 0.0
      %668 = vmatpush1.msra.mxu0 0.0
      %669 = vmatprep.subr.mxu0 0.0
      %670 = vmatpush1.msra.mxu0 0.0
      %671 = vmatprep.subr.mxu0 0.0
      %672 = vmatpush1.msra.mxu0 0.0
      %673 = vmatprep.subr.mxu0 0.0
      %674 = vmatpush1.msra.mxu0 0.0
      %675 = vmatprep.subr.mxu0 0.0
      %676 = vmatpush1.msra.mxu0 0.0
      %677 = vmatprep.subr.mxu0 0.0
      %678 = vmatpush1.msra.mxu0 0.0
      %679 = vmatprep.subr.mxu0 0.0
      %680 = vmatpush1.msra.mxu0 0.0
      %681 = vmatprep.subr.mxu0 0.0
      %682 = vmatpush1.msra.mxu0 0.0
      %683 = vmatprep.subr.mxu0 0.0
      %684 = vmatpush1.msra.mxu0 0.0
      %685 = vmatprep.subr.mxu0 0.0
      %686 = vmatpush1.msra.mxu0 0.0
      %687 = vmatprep.subr.mxu0 0.0
      %688 = vmatpush1.msra.mxu0 0.0
      %689 = vmatprep.subr.mxu0 0.0
      %690 = vmatpush1.msra.mxu0 0.0
      %691 = vmatprep.subr.mxu0 0.0
      %692 = vmatpush1.msra.mxu0 0.0
      %693 = vmatprep.subr.mxu0 0.0
      %694 = vmatpush1.msra.mxu0 0.0
      %695 = vmatprep.subr.mxu0 0.0
      %696 = vmatpush1.msra.mxu0 0.0
      %697 = vmatprep.subr.mxu0 0.0
      %698 = vmatpush1.msra.mxu0 0.0
      %699 = vmatprep.mubr.f32.mxu0 0.0
      %700 = vmatmul.mubr.f32.gmra.mrb[0].mxu0 %v621
      %v701 = vpop.f32.mrb[0].mxu0
      %v702 = vadd.f32 %v618, %v701
      %v703 = vpop.f32.mrb[0].mxu0
      %704 = vmatprep.mubr.f32.mxu0 0.0
      %705 = vmatmul.mubr.f32.gmra.mrb[0].mxu0 %v624
      %v706 = vpop.f32.mrb[0].mxu0
      %v707 = vadd.f32 %v618, %v706
      %v708 = vpop.f32.mrb[0].mxu0
      %709 = vmatprep.mubr.f32.mxu0 0.0
      %710 = vmatmul.mubr.f32.gmra.mrb[0].mxu0 %v627
      %v711 = vpop.f32.mrb[0].mxu0
      %v712 = vadd.f32 %v618, %v711
      %v713 = vpop.f32.mrb[0].mxu0
      %714 = vmatprep.mubr.f32.mxu0 0.0
      %715 = vmatmul.mubr.f32.gmra.mrb[0].mxu0 %v630
      %v716 = vpop.f32.mrb[0].mxu0
      %v717 = vadd.f32 %v618, %v716
      %v718 = vpop.f32.mrb[0].mxu0
      %719 = vdwg.mxu0
      %vm720 = vcmask 23552
      %v721 = vsel %vm720, %v702, -inf
      %722 = vmax.xlane.f32.xlu0 %v721
      %v723 = vpop.xlane.xlu0 %722
      %v724 = vsel %vm720, %v707, -inf
      %725 = vmax.xlane.f32.xlu0 %v724
      %v726 = vpop.xlane.xlu0 %725
      %v727 = vsel %vm720, %v712, -inf
      %728 = vmax.xlane.f32.xlu0 %v727
      %v729 = vpop.xlane.xlu0 %728
      %v730 = vsel %vm720, %v717, -inf
      %731 = vmax.xlane.f32.xlu0 %v730
      %v732 = vpop.xlane.xlu0 %731
      %v733 = vsub.f32 %v702, %v723
      %v734 = vsub.f32 %v707, %v726
      %v735 = vsub.f32 %v712, %v729
      %v736 = vsub.f32 %v717, %v732
      %v737 = vmul.f32 %v733, 1.442695
      %v738 = vpow.pop %v737
      %v739 = vmul.f32 %v734, 1.442695
      %v740 = vpow.pop %v739
      %v741 = vmul.f32 %v735, 1.442695
      %v742 = vpow.pop %v741
      %v743 = vmul.f32 %v736, 1.442695
      %v744 = vpow.pop %v743
      %v745 = vsel %vm720, %v738, 0.0
      %746 = vadd.xlane.f32.xlu0 %v745
      %v747 = vpop.xlane.xlu0 %746
      %v748 = vsel %vm720, %v740, 0.0
      %749 = vadd.xlane.f32.xlu0 %v748
      %v750 = vpop.xlane.xlu0 %749
      %v751 = vsel %vm720, %v742, 0.0
      %752 = vadd.xlane.f32.xlu0 %v751
      %v753 = vpop.xlane.xlu0 %752
      %v754 = vsel %vm720, %v744, 0.0
      %755 = vadd.xlane.f32.xlu0 %v754
      %v756 = vpop.xlane.xlu0 %755
      %v757 = vrcp.pop %v747
      %v758 = vrcp.pop %v750
      %v759 = vrcp.pop %v753
      %v760 = vrcp.pop %v756
      %v761 = vmul.f32 %v738, %v757
      %v762 = vmul.f32 %v740, %v758
      %v763 = vmul.f32 %v742, %v759
      %v764 = vmul.f32 %v744, %v760
      %765 = vst.msk [vmem:[%s280] sm:$0xff] %vm720, %v761
      %766 = vst.msk [vmem:[%s280 + $0x8] sm:$0xff] %vm720, %v762
      %767 = vst.msk [vmem:[%s280 + $0x10] sm:$0xff] %vm720, %v763
      %768 = vst.msk [vmem:[%s280 + $0x18] sm:$0xff] %vm720, %v764
      %s769 = smul.u32 4, %s18
      %p770 = scmp.lt.s32.totalorder %s769, 7
      %s771 = scalar_select %p770, %s769, 7
      %s772 = smul.addr %s771, 8
      %s773 = scalar_lea.vmem %s7, %s772
      // Predicated region
      $region49: #{tpu_custom_call.1} parent=47 // pred_check
        %p774 = pneg %p188
      $region50: #{tpu_custom_call.1} parent=47 // pred_check_branch
        %776 = sbr.rel (%p774) target = $region52
      $region51: #{tpu_custom_call.1} parent=47 // pred_region
        %s777 = smul.u32 4, %s18
      $region52: #{tpu_custom_call.1} parent=47 // pred_fallthru
        _
    $region48: #{tpu_custom_call.1} parent=5 // pred_fallthru
      _
    %p778 = scmp.le.s32.totalorder 2, %s13
    // Predicated region
    $region53: #{tpu_custom_call.1} parent=5 // pred_check
      %p779 = pneg %p778
    $region54: #{tpu_custom_call.1} parent=5 // pred_check_branch
      %781 = sbr.rel (%p779) target = $region56
    $region55: #{tpu_custom_call.1} parent=5 // pred_region
      %s782 = ssub.s32 %s13, 2
      // Predicated region
      $region57: #{tpu_custom_call.1} parent=55 // pred_check
        %p783 = pneg %p194
      $region58: #{tpu_custom_call.1} parent=55 // pred_check_branch
        %785 = sbr.rel (%p783) target = $region60
      $region59: #{tpu_custom_call.1} parent=55 // pred_region
        %s786 = smul.u32 4, %s19
        %p787 = scmp.lt.s32.totalorder %s786, 7
        %s788 = scalar_select %p787, %s786, 7
        %s789 = smul.addr %s788, 8
        %s790 = scalar_lea.vmem %s7, %s789
      $region60: #{tpu_custom_call.1} parent=55 // pred_fallthru
        _
    $region56: #{tpu_custom_call.1} parent=5 // pred_fallthru
      _
  $region6: #{tpu_custom_call.1} parent=0 // loop_footer
    %s17 = sadd.s32 1, %s13
  $region7: #{tpu_custom_call.1} parent=0 // loop_footer_branch
    %12 = sbr.rel target = $region3
  $region8: #{tpu_custom_call.1} parent=0 // loop_exit
    _

</llo_original>
